<compile_context>
chip_gen: v7x
topology: tpu7x:2x2x1
jax: 0.10.0
libtpu: 0.0.40
codegen_flags: <defaults>
</compile_context>

<pallas_src>
import jax
import jax.numpy as jnp
from jax.experimental import pallas as pl
from jax.experimental.pallas import tpu as pltpu


def _round_up(x, m):
    return ((x + m - 1) // m) * m


def _pick_tile_n(n, d, itemsize, cap=256):
    """Tokens per grid step: big enough to amortize per-step overhead, small
    enough that a double-buffered output block stays well under VMEM limits,
    rounded to the dtype-native sublane multiple."""
    sub = max(8, 32 // itemsize)                       # f32:8, bf16:16, i8:32
    by_vmem = max(sub, (2 * 1024 * 1024) // max(1, d * itemsize))
    tile = min(cap, by_vmem, _round_up(max(n, 1), sub))
    tile = max(sub, (tile // sub) * sub)
    return tile


# ----------------------------------------------------------------------------
# Kernel 1: table resident in VMEM (small / medium vocab) -- no per-row DMAs.
# ----------------------------------------------------------------------------
def _embedding_vmem_kernel(ids_ref, w_ref, o_ref):
    # ids_ref: (N_padded,) int32 in SMEM (scalar prefetch)
    # w_ref:   (V, D) whole embedding table in VMEM (block index constant)
    # o_ref:   (tile_n, D) output block in VMEM
    i = pl.program_id(0)
    tile_n = o_ref.shape[0]
    v = w_ref.shape[0]
    base = i * tile_n

    for j in range(tile_n):                     # static -> fully unrolled
        row = jnp.minimum(jnp.maximum(ids_ref[base + j], 0), v - 1)
        o_ref[pl.ds(j, 1), :] = w_ref[pl.ds(row, 1), :]


# ----------------------------------------------------------------------------
# Kernel 2: table stays in HBM (large vocab) -- row DMAs straight into o_ref.
# ----------------------------------------------------------------------------
def _embedding_hbm_kernel(ids_ref, w_hbm, o_ref, sem):
    # ids_ref: (N_padded,) int32 in SMEM (scalar prefetch)
    # w_hbm:   (V, D) embedding table left in HBM (pl.ANY)
    # o_ref:   (tile_n, D) output block in VMEM (DMA destination, no staging)
    # sem:     single shared DMA semaphore for the whole tile
    i = pl.program_id(0)
    tile_n = o_ref.shape[0]
    v = w_hbm.shape[0]
    base = i * tile_n

    # Issue all row gathers (fully unrolled; all DMAs in flight concurrently).
    for j in range(tile_n):
        row = jnp.minimum(jnp.maximum(ids_ref[base + j], 0), v - 1)
        pltpu.make_async_copy(
            w_hbm.at[pl.ds(row, 1), :],
            o_ref.at[pl.ds(j, 1), :],
            sem,
        ).start()

    # Drain: one wait per issued copy on the shared semaphore.  Only the byte
    # count / dst / sem matter for the wait, so use a constant source row and
    # avoid SMEM id re-reads right after the DMAs.
    for j in range(tile_n):
        pltpu.make_async_copy(
            w_hbm.at[pl.ds(0, 1), :],
            o_ref.at[pl.ds(j, 1), :],
            sem,
        ).wait()


# ----------------------------------------------------------------------------
# Wrapper
# ----------------------------------------------------------------------------
def _embedding_lookup_flat(flat_ids, weight, tile_n, use_vmem_table):
    n = flat_ids.shape[0]
    v, d = weight.shape

    n_padded = _round_up(n, tile_n)
    if n_padded != n:
        flat_ids = jnp.concatenate(
            [flat_ids, jnp.zeros((n_padded - n,), jnp.int32)])

    grid = (n_padded // tile_n,)
    out_spec = pl.BlockSpec((tile_n, d), lambda i, ids: (i, 0))

    if use_vmem_table:
        kernel = _embedding_vmem_kernel
        in_specs = [pl.BlockSpec((v, d), lambda i, ids: (0, 0))]   # resident
        scratch = []
    else:
        kernel = _embedding_hbm_kernel
        in_specs = [pl.BlockSpec(memory_space=pl.ANY)]             # stays in HBM
        scratch = [pltpu.SemaphoreType.DMA(())]

    out = pl.pallas_call(
        kernel,
        out_shape=jax.ShapeDtypeStruct((n_padded, d), weight.dtype),
        grid_spec=pltpu.PrefetchScalarGridSpec(
            num_scalar_prefetch=1,          # ids -> SMEM
            grid=grid,
            in_specs=in_specs,
            out_specs=out_spec,
            scratch_shapes=scratch,
        ),
        compiler_params=pltpu.CompilerParams(
            dimension_semantics=("parallel",),      # 2-TC split on v7x
            vmem_limit_bytes=32 * 1024 * 1024,
        ),
    )(flat_ids, weight)
    return out[:n]


def embedding_forward(ids, weight, *, tile_n=None,
                      vmem_table_budget_bytes=8 * 1024 * 1024,
                      max_ids_per_call=1 << 16):
    """ids: int array of shape (*Ds, IdsDim); weight: (V, D).

    Returns (*Ds, IdsDim, D) with weight.dtype, matching nn.Embedding.forward.
    """
    v, d = weight.shape
    orig_shape = ids.shape

    flat = ids.reshape(-1).astype(jnp.int32)
    n = flat.shape[0]
    itemsize = jnp.dtype(weight.dtype).itemsize

    use_vmem_table = (v * d * itemsize) <= vmem_table_budget_bytes
    if tile_n is None:
        tile_n = _pick_tile_n(min(n, max_ids_per_call), d, itemsize)

    if n > max_ids_per_call:
        # Chunk so the scalar-prefetched ids always fit comfortably in SMEM.
        chunks = []
        for s in range(0, n, max_ids_per_call):
            chunks.append(_embedding_lookup_flat(
                flat[s:s + max_ids_per_call], weight, tile_n, use_vmem_table))
        out = jnp.concatenate(chunks, axis=0)
    else:
        out = _embedding_lookup_flat(flat, weight, tile_n, use_vmem_table)

    return out.reshape(*orig_shape, d)


if __name__ == "__main__":
    key = jax.random.PRNGKey(0)
    k_w, k_ids, k_w2, k_ids2 = jax.random.split(key, 4)

    # --- Case 1: small vocab -> VMEM-resident fast path ---------------------
    num_embeddings = 64   # vocab size V
    embedding_dim = 32    # D
    batch, seq = 2, 8     # *Ds = (batch,), IdsDim = seq

    weight = jax.random.normal(k_w, (num_embeddings, embedding_dim),
                               dtype=jnp.float32)
    ids = jax.random.randint(k_ids, (batch, seq), 0, num_embeddings,
                             dtype=jnp.int32)

    out = jax.block_until_ready(embedding_forward(ids, weight))
    ref = jnp.take(weight, ids, axis=0)
    assert out.shape == (batch, seq, embedding_dim), out.shape
    assert out.dtype == weight.dtype, out.dtype
    assert jnp.allclose(out, ref, atol=1e-6), "VMEM path mismatch vs reference"

    # --- Case 2: force the HBM row-gather path (DMA straight into o_ref) ----
    v2, d2 = 512, 128
    weight2 = jax.random.normal(k_w2, (v2, d2), dtype=jnp.float32)
    ids2 = jax.random.randint(k_ids2, (3, 24), 0, v2, dtype=jnp.int32)

    out2 = jax.block_until_ready(
        embedding_forward(ids2, weight2, vmem_table_budget_bytes=0))
    ref2 = jnp.take(weight2, ids2, axis=0)
    assert out2.shape == (3, 24, d2), out2.shape
    assert out2.dtype == weight2.dtype, out2.dtype
    assert jnp.allclose(out2, ref2, atol=1e-6), "HBM path mismatch vs reference"

    print("KERNEL_OK")
</pallas_src>

<mosaic_0001>
module attributes {stable_mosaic.version = 11 : i64} {
  func.func @_embedding_vmem_kernel(%arg0: i32, %arg1: memref<16xi32, #tpu.memory_space<smem>>, %arg2: memref<64x32xf32, #tpu.memory_space<vmem>>, %arg3: memref<16x32xf32, #tpu.memory_space<vmem>>) attributes {dimension_semantics = [#tpu.dimension_semantics<parallel>], iteration_bounds = array<i64: 1>, scalar_prefetch = 1 : i64, scratch_operands = 0 : i64, tpu.core_type = #tpu.core_type<tc>, window_params = [{pipeline_mode = #tpu.pipeline_mode<synchronous>, transform_indices = @transform_0, window_bounds = array<i64: 64, 32>}, {transform_indices = @transform_1, window_bounds = array<i64: 16, 32>}]} {
    %c16_i32 = arith.constant 16 : i32
    %0 = arith.muli %arg0, %c16_i32 : i32
    %c0_i32 = arith.constant 0 : i32
    %1 = arith.addi %0, %c0_i32 : i32
    %2 = arith.index_cast %1 : i32 to index
    %3 = memref.load %arg1[%2] : memref<16xi32, #tpu.memory_space<smem>>
    %c0_i32_0 = arith.constant 0 : i32
    %4 = arith.maxsi %3, %c0_i32_0 : i32
    %c63_i32 = arith.constant 63 : i32
    %5 = arith.minsi %4, %c63_i32 : i32
    %6 = arith.index_cast %5 : i32 to index
    %c0 = arith.constant 0 : index
    %7 = vector.load %arg2[%6, %c0] : memref<64x32xf32, #tpu.memory_space<vmem>>, vector<1x32xf32>
    %c0_1 = arith.constant 0 : index
    %c0_2 = arith.constant 0 : index
    %8 = vector.load %arg3[%c0_1, %c0_2] : memref<16x32xf32, #tpu.memory_space<vmem>>, vector<1x32xf32>
    tpu.vector_store %arg3[%c0_1, %c0_2], %7 {strides = array<i32>} : memref<16x32xf32, #tpu.memory_space<vmem>>, vector<1x32xf32>,
    %c1_i32 = arith.constant 1 : i32
    %9 = arith.addi %0, %c1_i32 : i32
    %10 = arith.index_cast %9 : i32 to index
    %11 = memref.load %arg1[%10] : memref<16xi32, #tpu.memory_space<smem>>
    %c0_i32_3 = arith.constant 0 : i32
    %12 = arith.maxsi %11, %c0_i32_3 : i32
    %c63_i32_4 = arith.constant 63 : i32
    %13 = arith.minsi %12, %c63_i32_4 : i32
    %14 = arith.index_cast %13 : i32 to index
    %c0_5 = arith.constant 0 : index
    %15 = vector.load %arg2[%14, %c0_5] : memref<64x32xf32, #tpu.memory_space<vmem>>, vector<1x32xf32>
    %c1 = arith.constant 1 : index
    %c0_6 = arith.constant 0 : index
    %16 = vector.load %arg3[%c1, %c0_6] : memref<16x32xf32, #tpu.memory_space<vmem>>, vector<1x32xf32>
    tpu.vector_store %arg3[%c1, %c0_6], %15 {strides = array<i32>} : memref<16x32xf32, #tpu.memory_space<vmem>>, vector<1x32xf32>,
    %c2_i32 = arith.constant 2 : i32
    %17 = arith.addi %0, %c2_i32 : i32
    %18 = arith.index_cast %17 : i32 to index
    %19 = memref.load %arg1[%18] : memref<16xi32, #tpu.memory_space<smem>>
    %c0_i32_7 = arith.constant 0 : i32
    %20 = arith.maxsi %19, %c0_i32_7 : i32
    %c63_i32_8 = arith.constant 63 : i32
    %21 = arith.minsi %20, %c63_i32_8 : i32
    %22 = arith.index_cast %21 : i32 to index
    %c0_9 = arith.constant 0 : index
    %23 = vector.load %arg2[%22, %c0_9] : memref<64x32xf32, #tpu.memory_space<vmem>>, vector<1x32xf32>
    %c2 = arith.constant 2 : index
    %c0_10 = arith.constant 0 : index
    %24 = vector.load %arg3[%c2, %c0_10] : memref<16x32xf32, #tpu.memory_space<vmem>>, vector<1x32xf32>
    tpu.vector_store %arg3[%c2, %c0_10], %23 {strides = array<i32>} : memref<16x32xf32, #tpu.memory_space<vmem>>, vector<1x32xf32>,
    %c3_i32 = arith.constant 3 : i32
    %25 = arith.addi %0, %c3_i32 : i32
    %26 = arith.index_cast %25 : i32 to index
    %27 = memref.load %arg1[%26] : memref<16xi32, #tpu.memory_space<smem>>
    %c0_i32_11 = arith.constant 0 : i32
    %28 = arith.maxsi %27, %c0_i32_11 : i32
    %c63_i32_12 = arith.constant 63 : i32
    %29 = arith.minsi %28, %c63_i32_12 : i32
    %30 = arith.index_cast %29 : i32 to index
    %c0_13 = arith.constant 0 : index
    %31 = vector.load %arg2[%30, %c0_13] : memref<64x32xf32, #tpu.memory_space<vmem>>, vector<1x32xf32>
    %c3 = arith.constant 3 : index
    %c0_14 = arith.constant 0 : index
    %32 = vector.load %arg3[%c3, %c0_14] : memref<16x32xf32, #tpu.memory_space<vmem>>, vector<1x32xf32>
    tpu.vector_store %arg3[%c3, %c0_14], %31 {strides = array<i32>} : memref<16x32xf32, #tpu.memory_space<vmem>>, vector<1x32xf32>,
    %c4_i32 = arith.constant 4 : i32
    %33 = arith.addi %0, %c4_i32 : i32
    %34 = arith.index_cast %33 : i32 to index
    %35 = memref.load %arg1[%34] : memref<16xi32, #tpu.memory_space<smem>>
    %c0_i32_15 = arith.constant 0 : i32
    %36 = arith.maxsi %35, %c0_i32_15 : i32
    %c63_i32_16 = arith.constant 63 : i32
    %37 = arith.minsi %36, %c63_i32_16 : i32
    %38 = arith.index_cast %37 : i32 to index
    %c0_17 = arith.constant 0 : index
    %39 = vector.load %arg2[%38, %c0_17] : memref<64x32xf32, #tpu.memory_space<vmem>>, vector<1x32xf32>
    %c4 = arith.constant 4 : index
    %c0_18 = arith.constant 0 : index
    %40 = vector.load %arg3[%c4, %c0_18] : memref<16x32xf32, #tpu.memory_space<vmem>>, vector<1x32xf32>
    tpu.vector_store %arg3[%c4, %c0_18], %39 {strides = array<i32>} : memref<16x32xf32, #tpu.memory_space<vmem>>, vector<1x32xf32>,
    %c5_i32 = arith.constant 5 : i32
    %41 = arith.addi %0, %c5_i32 : i32
    %42 = arith.index_cast %41 : i32 to index
    %43 = memref.load %arg1[%42] : memref<16xi32, #tpu.memory_space<smem>>
    %c0_i32_19 = arith.constant 0 : i32
    %44 = arith.maxsi %43, %c0_i32_19 : i32
    %c63_i32_20 = arith.constant 63 : i32
    %45 = arith.minsi %44, %c63_i32_20 : i32
    %46 = arith.index_cast %45 : i32 to index
    %c0_21 = arith.constant 0 : index
    %47 = vector.load %arg2[%46, %c0_21] : memref<64x32xf32, #tpu.memory_space<vmem>>, vector<1x32xf32>
    %c5 = arith.constant 5 : index
    %c0_22 = arith.constant 0 : index
    %48 = vector.load %arg3[%c5, %c0_22] : memref<16x32xf32, #tpu.memory_space<vmem>>, vector<1x32xf32>
    tpu.vector_store %arg3[%c5, %c0_22], %47 {strides = array<i32>} : memref<16x32xf32, #tpu.memory_space<vmem>>, vector<1x32xf32>,
    %c6_i32 = arith.constant 6 : i32
    %49 = arith.addi %0, %c6_i32 : i32
    %50 = arith.index_cast %49 : i32 to index
    %51 = memref.load %arg1[%50] : memref<16xi32, #tpu.memory_space<smem>>
    %c0_i32_23 = arith.constant 0 : i32
    %52 = arith.maxsi %51, %c0_i32_23 : i32
    %c63_i32_24 = arith.constant 63 : i32
    %53 = arith.minsi %52, %c63_i32_24 : i32
    %54 = arith.index_cast %53 : i32 to index
    %c0_25 = arith.constant 0 : index
    %55 = vector.load %arg2[%54, %c0_25] : memref<64x32xf32, #tpu.memory_space<vmem>>, vector<1x32xf32>
    %c6 = arith.constant 6 : index
    %c0_26 = arith.constant 0 : index
    %56 = vector.load %arg3[%c6, %c0_26] : memref<16x32xf32, #tpu.memory_space<vmem>>, vector<1x32xf32>
    tpu.vector_store %arg3[%c6, %c0_26], %55 {strides = array<i32>} : memref<16x32xf32, #tpu.memory_space<vmem>>, vector<1x32xf32>,
    %c7_i32 = arith.constant 7 : i32
    %57 = arith.addi %0, %c7_i32 : i32
    %58 = arith.index_cast %57 : i32 to index
    %59 = memref.load %arg1[%58] : memref<16xi32, #tpu.memory_space<smem>>
    %c0_i32_27 = arith.constant 0 : i32
    %60 = arith.maxsi %59, %c0_i32_27 : i32
    %c63_i32_28 = arith.constant 63 : i32
    %61 = arith.minsi %60, %c63_i32_28 : i32
    %62 = arith.index_cast %61 : i32 to index
    %c0_29 = arith.constant 0 : index
    %63 = vector.load %arg2[%62, %c0_29] : memref<64x32xf32, #tpu.memory_space<vmem>>, vector<1x32xf32>
    %c7 = arith.constant 7 : index
    %c0_30 = arith.constant 0 : index
    %64 = vector.load %arg3[%c7, %c0_30] : memref<16x32xf32, #tpu.memory_space<vmem>>, vector<1x32xf32>
    tpu.vector_store %arg3[%c7, %c0_30], %63 {strides = array<i32>} : memref<16x32xf32, #tpu.memory_space<vmem>>, vector<1x32xf32>,
    %c8_i32 = arith.constant 8 : i32
    %65 = arith.addi %0, %c8_i32 : i32
    %66 = arith.index_cast %65 : i32 to index
    %67 = memref.load %arg1[%66] : memref<16xi32, #tpu.memory_space<smem>>
    %c0_i32_31 = arith.constant 0 : i32
    %68 = arith.maxsi %67, %c0_i32_31 : i32
    %c63_i32_32 = arith.constant 63 : i32
    %69 = arith.minsi %68, %c63_i32_32 : i32
    %70 = arith.index_cast %69 : i32 to index
    %c0_33 = arith.constant 0 : index
    %71 = vector.load %arg2[%70, %c0_33] : memref<64x32xf32, #tpu.memory_space<vmem>>, vector<1x32xf32>
    %c8 = arith.constant 8 : index
    %c0_34 = arith.constant 0 : index
    %72 = vector.load %arg3[%c8, %c0_34] : memref<16x32xf32, #tpu.memory_space<vmem>>, vector<1x32xf32>
    tpu.vector_store %arg3[%c8, %c0_34], %71 {strides = array<i32>} : memref<16x32xf32, #tpu.memory_space<vmem>>, vector<1x32xf32>,
    %c9_i32 = arith.constant 9 : i32
    %73 = arith.addi %0, %c9_i32 : i32
    %74 = arith.index_cast %73 : i32 to index
    %75 = memref.load %arg1[%74] : memref<16xi32, #tpu.memory_space<smem>>
    %c0_i32_35 = arith.constant 0 : i32
    %76 = arith.maxsi %75, %c0_i32_35 : i32
    %c63_i32_36 = arith.constant 63 : i32
    %77 = arith.minsi %76, %c63_i32_36 : i32
    %78 = arith.index_cast %77 : i32 to index
    %c0_37 = arith.constant 0 : index
    %79 = vector.load %arg2[%78, %c0_37] : memref<64x32xf32, #tpu.memory_space<vmem>>, vector<1x32xf32>
    %c9 = arith.constant 9 : index
    %c0_38 = arith.constant 0 : index
    %80 = vector.load %arg3[%c9, %c0_38] : memref<16x32xf32, #tpu.memory_space<vmem>>, vector<1x32xf32>
    tpu.vector_store %arg3[%c9, %c0_38], %79 {strides = array<i32>} : memref<16x32xf32, #tpu.memory_space<vmem>>, vector<1x32xf32>,
    %c10_i32 = arith.constant 10 : i32
    %81 = arith.addi %0, %c10_i32 : i32
    %82 = arith.index_cast %81 : i32 to index
    %83 = memref.load %arg1[%82] : memref<16xi32, #tpu.memory_space<smem>>
    %c0_i32_39 = arith.constant 0 : i32
    %84 = arith.maxsi %83, %c0_i32_39 : i32
    %c63_i32_40 = arith.constant 63 : i32
    %85 = arith.minsi %84, %c63_i32_40 : i32
    %86 = arith.index_cast %85 : i32 to index
    %c0_41 = arith.constant 0 : index
    %87 = vector.load %arg2[%86, %c0_41] : memref<64x32xf32, #tpu.memory_space<vmem>>, vector<1x32xf32>
    %c10 = arith.constant 10 : index
    %c0_42 = arith.constant 0 : index
    %88 = vector.load %arg3[%c10, %c0_42] : memref<16x32xf32, #tpu.memory_space<vmem>>, vector<1x32xf32>
    tpu.vector_store %arg3[%c10, %c0_42], %87 {strides = array<i32>} : memref<16x32xf32, #tpu.memory_space<vmem>>, vector<1x32xf32>,
    %c11_i32 = arith.constant 11 : i32
    %89 = arith.addi %0, %c11_i32 : i32
    %90 = arith.index_cast %89 : i32 to index
    %91 = memref.load %arg1[%90] : memref<16xi32, #tpu.memory_space<smem>>
    %c0_i32_43 = arith.constant 0 : i32
    %92 = arith.maxsi %91, %c0_i32_43 : i32
    %c63_i32_44 = arith.constant 63 : i32
    %93 = arith.minsi %92, %c63_i32_44 : i32
    %94 = arith.index_cast %93 : i32 to index
    %c0_45 = arith.constant 0 : index
    %95 = vector.load %arg2[%94, %c0_45] : memref<64x32xf32, #tpu.memory_space<vmem>>, vector<1x32xf32>
    %c11 = arith.constant 11 : index
    %c0_46 = arith.constant 0 : index
    %96 = vector.load %arg3[%c11, %c0_46] : memref<16x32xf32, #tpu.memory_space<vmem>>, vector<1x32xf32>
    tpu.vector_store %arg3[%c11, %c0_46], %95 {strides = array<i32>} : memref<16x32xf32, #tpu.memory_space<vmem>>, vector<1x32xf32>,
    %c12_i32 = arith.constant 12 : i32
    %97 = arith.addi %0, %c12_i32 : i32
    %98 = arith.index_cast %97 : i32 to index
    %99 = memref.load %arg1[%98] : memref<16xi32, #tpu.memory_space<smem>>
    %c0_i32_47 = arith.constant 0 : i32
    %100 = arith.maxsi %99, %c0_i32_47 : i32
    %c63_i32_48 = arith.constant 63 : i32
    %101 = arith.minsi %100, %c63_i32_48 : i32
    %102 = arith.index_cast %101 : i32 to index
    %c0_49 = arith.constant 0 : index
    %103 = vector.load %arg2[%102, %c0_49] : memref<64x32xf32, #tpu.memory_space<vmem>>, vector<1x32xf32>
    %c12 = arith.constant 12 : index
    %c0_50 = arith.constant 0 : index
    %104 = vector.load %arg3[%c12, %c0_50] : memref<16x32xf32, #tpu.memory_space<vmem>>, vector<1x32xf32>
    tpu.vector_store %arg3[%c12, %c0_50], %103 {strides = array<i32>} : memref<16x32xf32, #tpu.memory_space<vmem>>, vector<1x32xf32>,
    %c13_i32 = arith.constant 13 : i32
    %105 = arith.addi %0, %c13_i32 : i32
    %106 = arith.index_cast %105 : i32 to index
    %107 = memref.load %arg1[%106] : memref<16xi32, #tpu.memory_space<smem>>
    %c0_i32_51 = arith.constant 0 : i32
    %108 = arith.maxsi %107, %c0_i32_51 : i32
    %c63_i32_52 = arith.constant 63 : i32
    %109 = arith.minsi %108, %c63_i32_52 : i32
    %110 = arith.index_cast %109 : i32 to index
    %c0_53 = arith.constant 0 : index
    %111 = vector.load %arg2[%110, %c0_53] : memref<64x32xf32, #tpu.memory_space<vmem>>, vector<1x32xf32>
    %c13 = arith.constant 13 : index
    %c0_54 = arith.constant 0 : index
    %112 = vector.load %arg3[%c13, %c0_54] : memref<16x32xf32, #tpu.memory_space<vmem>>, vector<1x32xf32>
    tpu.vector_store %arg3[%c13, %c0_54], %111 {strides = array<i32>} : memref<16x32xf32, #tpu.memory_space<vmem>>, vector<1x32xf32>,
    %c14_i32 = arith.constant 14 : i32
    %113 = arith.addi %0, %c14_i32 : i32
    %114 = arith.index_cast %113 : i32 to index
    %115 = memref.load %arg1[%114] : memref<16xi32, #tpu.memory_space<smem>>
    %c0_i32_55 = arith.constant 0 : i32
    %116 = arith.maxsi %115, %c0_i32_55 : i32
    %c63_i32_56 = arith.constant 63 : i32
    %117 = arith.minsi %116, %c63_i32_56 : i32
    %118 = arith.index_cast %117 : i32 to index
    %c0_57 = arith.constant 0 : index
    %119 = vector.load %arg2[%118, %c0_57] : memref<64x32xf32, #tpu.memory_space<vmem>>, vector<1x32xf32>
    %c14 = arith.constant 14 : index
    %c0_58 = arith.constant 0 : index
    %120 = vector.load %arg3[%c14, %c0_58] : memref<16x32xf32, #tpu.memory_space<vmem>>, vector<1x32xf32>
    tpu.vector_store %arg3[%c14, %c0_58], %119 {strides = array<i32>} : memref<16x32xf32, #tpu.memory_space<vmem>>, vector<1x32xf32>,
    %c15_i32 = arith.constant 15 : i32
    %121 = arith.addi %0, %c15_i32 : i32
    %122 = arith.index_cast %121 : i32 to index
    %123 = memref.load %arg1[%122] : memref<16xi32, #tpu.memory_space<smem>>
    %c0_i32_59 = arith.constant 0 : i32
    %124 = arith.maxsi %123, %c0_i32_59 : i32
    %c63_i32_60 = arith.constant 63 : i32
    %125 = arith.minsi %124, %c63_i32_60 : i32
    %126 = arith.index_cast %125 : i32 to index
    %c0_61 = arith.constant 0 : index
    %127 = vector.load %arg2[%126, %c0_61] : memref<64x32xf32, #tpu.memory_space<vmem>>, vector<1x32xf32>
    %c15 = arith.constant 15 : index
    %c0_62 = arith.constant 0 : index
    %128 = vector.load %arg3[%c15, %c0_62] : memref<16x32xf32, #tpu.memory_space<vmem>>, vector<1x32xf32>
    tpu.vector_store %arg3[%c15, %c0_62], %127 {strides = array<i32>} : memref<16x32xf32, #tpu.memory_space<vmem>>, vector<1x32xf32>,
    return
  }
  func.func @transform_0(%arg0: i32, %arg1: memref<16xi32, #tpu.memory_space<smem>>) -> (i32, i32) {
    %c0_i32 = arith.constant 0 : i32
    %c0_i32_0 = arith.constant 0 : i32
    %c0_i32_1 = arith.constant 0 : i32
    return %c0_i32, %c0_i32_0 : i32, i32
  }
  func.func @transform_1(%arg0: i32, %arg1: memref<16xi32, #tpu.memory_space<smem>>) -> (i32, i32) {
    %c0_i32 = arith.constant 0 : i32
    %c0_i32_0 = arith.constant 0 : i32
    return %arg0, %c0_i32 : i32, i32
  }
}

</mosaic_0001>

<llo_original>
// kernel: tpu_custom_call.1
$region0: #{tpu_custom_call.1}
  #allocation0 [shape = 'u32[]', space=smem, size = 0x4, offset = 0x4, fixed_abs, tag = 'smem constant byte address 0x4 - core index']
  #allocation1 [shape = 'u32[144,128]{1,0:T(1,128)}', space=vmem, size = 0x12000, scoped, tag = 'internal scratch']
  #allocation2 [shape = 's32[1]{0}', space=sflag, size = 0x4, scoped, tag = 'scoped memory for tpu_custom_call.1']
  #allocation3 [shape = 'u8[512]{0}', space=smem, size = 0x200, scoped, tag = 'prefetched SMEM operand 0']
  %s0 = inlined_call_operand.vmem [shape: s32[16], index: 0, kind: input, shape index: {}]
  %s1 = inlined_call_operand.vmem [shape: f32[64,32], index: 1, kind: input, shape index: {}]
  %s2 = inlined_call_operand.hbm [shape: f32[16,32], index: 2, kind: output, shape index: {}]
  %s3 = sld [smem:[#allocation0]]
  $region14: #{tpu_custom_call.1} parent=0
    _
  %s5 = ssub.s32 1, %s3
  %s6 = scalar_select 0, %s5, %s3
  %s7 = sshll.u32 %s0, 4
  %s8 = int_to_ptr.vmem [resolvable:$true] %s7
  %10 = dma.vmem_to_smem %s8, 16, [#allocation3], [#allocation2]
  %11 = dma.done [#allocation2], 16
  %12 = sfence
  $region1: #{tpu_custom_call.1} parent=0
    #allocation4 [shape = 'u8[8192]{0}', space=vmem, size = 0x2000, scoped, tag = 'output window, operand 0, single buffered']
    #allocation5 [shape = 's32[1]{0}', space=sflag, size = 0x4, scoped, tag = 'scoped memory for tpu_custom_call.1']
    %13 = vsyncpa [#allocation5], 0
    // Predicated region
    $region2: #{tpu_custom_call.1} parent=1 // pred_check
      _
    $region3: #{tpu_custom_call.1} parent=1 // pred_check_branch
      %15 = sbr.rel (0) target = $region5
    $region4: #{tpu_custom_call.1} parent=1 // pred_region
      _
    $region5: #{tpu_custom_call.1} parent=1 // pred_fallthru
      _
    %s16 = smul.u32 0, 16
    %s17 = sld [smem:[#allocation3 + %s16]]
    %p18 = scmp.gt.s32.totalorder %s17, 0
    %s19 = scalar_select %p18, %s17, 0
    %p20 = scmp.lt.s32.totalorder %s19, 63
    %s21 = scalar_select %p20, %s19, 63
    %s22 = scalar_lea.vmem %s1, %s21
    %v23 = vld [vmem:[%s22] sm:$0x1]
    %vm24 = vcmask 253952
    %25 = vst.msk [vmem:[#allocation4] sm:$0x1] %vm24, %v23
    %s26 = sadd.s32 %s16, 1
    %s27 = sld [smem:[#allocation3 + %s26]]
    %p28 = scmp.gt.s32.totalorder %s27, 0
    %s29 = scalar_select %p28, %s27, 0
    %p30 = scmp.lt.s32.totalorder %s29, 63
    %s31 = scalar_select %p30, %s29, 63
    %s32 = scalar_lea.vmem %s1, %s31
    %v33 = vld [vmem:[%s32] sm:$0x1]
    %34 = vst.msk [vmem:[#allocation4 + $0x1] sm:$0x1] %vm24, %v33
    %s35 = sadd.s32 %s16, 2
    %s36 = sld [smem:[#allocation3 + %s35]]
    %p37 = scmp.gt.s32.totalorder %s36, 0
    %s38 = scalar_select %p37, %s36, 0
    %p39 = scmp.lt.s32.totalorder %s38, 63
    %s40 = scalar_select %p39, %s38, 63
    %s41 = scalar_lea.vmem %s1, %s40
    %v42 = vld [vmem:[%s41] sm:$0x1]
    %43 = vst.msk [vmem:[#allocation4 + $0x2] sm:$0x1] %vm24, %v42
    %s44 = sadd.s32 %s16, 3
    %s45 = sld [smem:[#allocation3 + %s44]]
    %p46 = scmp.gt.s32.totalorder %s45, 0
    %s47 = scalar_select %p46, %s45, 0
    %p48 = scmp.lt.s32.totalorder %s47, 63
    %s49 = scalar_select %p48, %s47, 63
    %s50 = scalar_lea.vmem %s1, %s49
    %v51 = vld [vmem:[%s50] sm:$0x1]
    %52 = vst.msk [vmem:[#allocation4 + $0x3] sm:$0x1] %vm24, %v51
    %s53 = sadd.s32 %s16, 4
    %s54 = sld [smem:[#allocation3 + %s53]]
    %p55 = scmp.gt.s32.totalorder %s54, 0
    %s56 = scalar_select %p55, %s54, 0
    %p57 = scmp.lt.s32.totalorder %s56, 63
    %s58 = scalar_select %p57, %s56, 63
    %s59 = scalar_lea.vmem %s1, %s58
    %v60 = vld [vmem:[%s59] sm:$0x1]
    %61 = vst.msk [vmem:[#allocation4 + $0x4] sm:$0x1] %vm24, %v60
    %s62 = sadd.s32 %s16, 5
    %s63 = sld [smem:[#allocation3 + %s62]]
    %p64 = scmp.gt.s32.totalorder %s63, 0
    %s65 = scalar_select %p64, %s63, 0
    %p66 = scmp.lt.s32.totalorder %s65, 63
    %s67 = scalar_select %p66, %s65, 63
    %s68 = scalar_lea.vmem %s1, %s67
    %v69 = vld [vmem:[%s68] sm:$0x1]
    %70 = vst.msk [vmem:[#allocation4 + $0x5] sm:$0x1] %vm24, %v69
    %s71 = sadd.s32 %s16, 6
    %s72 = sld [smem:[#allocation3 + %s71]]
    %p73 = scmp.gt.s32.totalorder %s72, 0
    %s74 = scalar_select %p73, %s72, 0
    %p75 = scmp.lt.s32.totalorder %s74, 63
    %s76 = scalar_select %p75, %s74, 63
    %s77 = scalar_lea.vmem %s1, %s76
    %v78 = vld [vmem:[%s77] sm:$0x1]
    %79 = vst.msk [vmem:[#allocation4 + $0x6] sm:$0x1] %vm24, %v78
    %s80 = sadd.s32 %s16, 7
    %s81 = sld [smem:[#allocation3 + %s80]]
    %p82 = scmp.gt.s32.totalorder %s81, 0
    %s83 = scalar_select %p82, %s81, 0
    %p84 = scmp.lt.s32.totalorder %s83, 63
    %s85 = scalar_select %p84, %s83, 63
    %s86 = scalar_lea.vmem %s1, %s85
    %v87 = vld [vmem:[%s86] sm:$0x1]
    %88 = vst.msk [vmem:[#allocation4 + $0x7] sm:$0x1] %vm24, %v87
    %s89 = sadd.s32 %s16, 8
    %s90 = sld [smem:[#allocation3 + %s89]]
    %p91 = scmp.gt.s32.totalorder %s90, 0
    %s92 = scalar_select %p91, %s90, 0
    %p93 = scmp.lt.s32.totalorder %s92, 63
    %s94 = scalar_select %p93, %s92, 63
    %s95 = scalar_lea.vmem %s1, %s94
    %v96 = vld [vmem:[%s95] sm:$0x1]
    %97 = vst.msk [vmem:[#allocation4 + $0x8] sm:$0x1] %vm24, %v96
    %s98 = sadd.s32 %s16, 9
    %s99 = sld [smem:[#allocation3 + %s98]]
    %p100 = scmp.gt.s32.totalorder %s99, 0
    %s101 = scalar_select %p100, %s99, 0
    %p102 = scmp.lt.s32.totalorder %s101, 63
    %s103 = scalar_select %p102, %s101, 63
    %s104 = scalar_lea.vmem %s1, %s103
    %v105 = vld [vmem:[%s104] sm:$0x1]
    %106 = vst.msk [vmem:[#allocation4 + $0x9] sm:$0x1] %vm24, %v105
    %s107 = sadd.s32 %s16, 10
    %s108 = sld [smem:[#allocation3 + %s107]]
    %p109 = scmp.gt.s32.totalorder %s108, 0
    %s110 = scalar_select %p109, %s108, 0
    %p111 = scmp.lt.s32.totalorder %s110, 63
    %s112 = scalar_select %p111, %s110, 63
    %s113 = scalar_lea.vmem %s1, %s112
    %v114 = vld [vmem:[%s113] sm:$0x1]
    %115 = vst.msk [vmem:[#allocation4 + $0xa] sm:$0x1] %vm24, %v114
    %s116 = sadd.s32 %s16, 11
    %s117 = sld [smem:[#allocation3 + %s116]]
    %p118 = scmp.gt.s32.totalorder %s117, 0
    %s119 = scalar_select %p118, %s117, 0
    %p120 = scmp.lt.s32.totalorder %s119, 63
    %s121 = scalar_select %p120, %s119, 63
    %s122 = scalar_lea.vmem %s1, %s121
    %v123 = vld [vmem:[%s122] sm:$0x1]
    %124 = vst.msk [vmem:[#allocation4 + $0xb] sm:$0x1] %vm24, %v123
    %s125 = sadd.s32 %s16, 12
    %s126 = sld [smem:[#allocation3 + %s125]]
    %p127 = scmp.gt.s32.totalorder %s126, 0
    %s128 = scalar_select %p127, %s126, 0
    %p129 = scmp.lt.s32.totalorder %s128, 63
    %s130 = scalar_select %p129, %s128, 63
    %s131 = scalar_lea.vmem %s1, %s130
    %v132 = vld [vmem:[%s131] sm:$0x1]
    %133 = vst.msk [vmem:[#allocation4 + $0xc] sm:$0x1] %vm24, %v132
    %s134 = sadd.s32 %s16, 13
    %s135 = sld [smem:[#allocation3 + %s134]]
    %p136 = scmp.gt.s32.totalorder %s135, 0
    %s137 = scalar_select %p136, %s135, 0
    %p138 = scmp.lt.s32.totalorder %s137, 63
    %s139 = scalar_select %p138, %s137, 63
    %s140 = scalar_lea.vmem %s1, %s139
    %v141 = vld [vmem:[%s140] sm:$0x1]
    %142 = vst.msk [vmem:[#allocation4 + $0xd] sm:$0x1] %vm24, %v141
    %s143 = sadd.s32 %s16, 14
    %s144 = sld [smem:[#allocation3 + %s143]]
    %p145 = scmp.gt.s32.totalorder %s144, 0
    %s146 = scalar_select %p145, %s144, 0
    %p147 = scmp.lt.s32.totalorder %s146, 63
    %s148 = scalar_select %p147, %s146, 63
    %s149 = scalar_lea.vmem %s1, %s148
    %v150 = vld [vmem:[%s149] sm:$0x1]
    %151 = vst.msk [vmem:[#allocation4 + $0xe] sm:$0x1] %vm24, %v150
    %s152 = sadd.s32 %s16, 15
    %s153 = sld [smem:[#allocation3 + %s152]]
    %p154 = scmp.gt.s32.totalorder %s153, 0
    %s155 = scalar_select %p154, %s153, 0
    %p156 = scmp.lt.s32.totalorder %s155, 63
    %s157 = scalar_select %p156, %s155, 63
    %s158 = scalar_lea.vmem %s1, %s157
    %v159 = vld [vmem:[%s158] sm:$0x1]
    %160 = vst.msk [vmem:[#allocation4 + $0xf] sm:$0x1] %vm24, %v159
    // Predicated region
    $region6: #{tpu_custom_call.1} parent=1 // pred_check
      _
    $region7: #{tpu_custom_call.1} parent=1 // pred_check_branch
      %162 = sbr.rel (0) target = $region9
    $region8: #{tpu_custom_call.1} parent=1 // pred_region
      %s164 = ssub.s32 256, 256
      %165 = vsyncadd [#allocation5], %s164
      %s166 = sshll.u32 [#allocation4], 4
      %s167 = int_to_ptr.vmem [resolvable:$true] %s166
      %172 = dma.vmem_to_hbm [thread:$0]  %s167, 256, %s2, [#allocation5], 128, 128, 8
    $region9: #{tpu_custom_call.1} parent=1 // pred_fallthru
      _
    // Predicated region
    $region10: #{tpu_custom_call.1} parent=1 // pred_check
      _
    $region11: #{tpu_custom_call.1} parent=1 // pred_check_branch
      %174 = sbr.rel (0) target = $region13
    $region12: #{tpu_custom_call.1} parent=1 // pred_region
      %175 = dma.done [#allocation5], 256
    $region13: #{tpu_custom_call.1} parent=1 // pred_fallthru
      _
    %176 = vsyncpa [#allocation5], 1

</llo_original>
